<compile_context>
chip_gen: v7x
topology: tpu7x:2x2x1
jax: 0.10.0
libtpu: 0.0.40
codegen_flags: <defaults>
</compile_context>

<pallas_src>
import functools

import jax
import jax.numpy as jnp
from jax.experimental import pallas as pl
from jax.experimental.pallas import tpu as pltpu

COUT_PAD = 8  # Cout (6) padded to a full sublane tile


def conv2d_kernel(x_ref, wb_ref, o_ref, *, Cin, KH, KW, W):
    """Direct conv as 27 VPU broadcast-FMAs over (N, 8, OH*W) lane/sublane-dense slabs.

    x_ref:  (Cin, N, HWP)          VMEM f32 -- flat spatial axis on lanes (padded),
                                               batch on sublanes
    wb_ref: (Cin*KH*KW + 1, 8, 1)  VMEM f32 -- per-tap weight columns; last row = bias
    o_ref:  (N, 8, OH*W)           VMEM     -- Cout on sublanes, lane-dense output
    """
    _, N, _ = x_ref.shape
    _, CP, LP = o_ref.shape
    KK = Cin * KH * KW

    x = x_ref[...]      # (Cin, N, HWP): one load, ~6 KB -> a few vregs
    wb = wb_ref[...]    # (KK+1, 8, 1)

    # Bias folded into the accumulator init (epilogue fused; no separate add pass).
    acc = jnp.broadcast_to(wb[KK][None, :, :], (N, CP, LP)).astype(jnp.float32)

    # out[n, co, oh*W + ow] =
    #   b[co] + sum_{ci,kh,kw} w[co,ci,kh,kw] * x[ci, n, (oh+kh)*W + (ow+kw)]
    # For a fixed tap the sources form ONE contiguous lane slice (columns with
    # ow >= OW are junk and are dropped in the wrapper).  Each slice and its sublane
    # broadcast are emitted once per tap and reused for both batch slabs; the weight
    # column (8, 1) lane-broadcasts against it -> pure VALU work, no MXU, no splats.
    k = 0
    for ci in range(Cin):
        for kh in range(KH):
            for kw in range(KW):
                off = kh * W + kw
                window = x[ci, :, off:off + LP]                       # (N, LP) lane slice
                acc = acc + wb[k][None, :, :] * window[:, None, :]    # (1,8,1)*(N,1,LP)
                k += 1

    o_ref[...] = acc.astype(o_ref.dtype)                              # dense (N,8,LP) store


def conv2d_pallas(x_nchw, w_oihw, bias):
    """MyNN.forward: Conv2d(3, 6, kernel_size=3, stride=1, padding=0). NCHW in/out."""
    N, Cin, H, W = x_nchw.shape
    Cout, Cin_w, KH, KW = w_oihw.shape
    assert Cin_w == Cin and Cout <= COUT_PAD
    OH, OW = H - KH + 1, W - KW + 1

    LP = OH * W                        # lane-dense output width (224); ow >= OW is junk
    off_max = (KH - 1) * W + (KW - 1)  # largest tap offset (34)
    HWP = max(H * W, off_max + LP)     # pad flat image so every tap's slice is in bounds
    KK = Cin * KH * KW

    # Window-trick validity (review correctness note): this implementation assumes
    # stride=1 / padding=0 and that every 224-wide tap slice fits the padded row.
    assert off_max + LP <= HWP and LP >= (OH - 1) * W + OW

    # --- layout plumbing (tiny XLA ops outside the kernel; fuse into ~1 op each) ---
    # input: NCHW -> (Cin, N, H*W), pad flat spatial axis 256 -> 258.
    x_cnl = jnp.transpose(x_nchw, (1, 0, 2, 3)).reshape(Cin, N, H * W)
    x_pad = jnp.pad(x_cnl, ((0, 0), (0, 0), (0, HWP - H * W)))

    # merged weight+bias operand: (KK+1, 8, 1); rows 0..KK-1 = tap weights over Cout
    # (k order = (ci, kh, kw)), row KK = bias; Cout padded 6 -> 8 with zeros.
    w_k = jnp.transpose(w_oihw.reshape(Cout, KK), (1, 0))            # (KK, Cout)
    wb = jnp.concatenate([w_k, bias[None, :]], axis=0)               # (KK+1, Cout)
    wb = jnp.pad(wb, ((0, 0), (0, COUT_PAD - Cout))).reshape(KK + 1, COUT_PAD, 1)

    kernel = functools.partial(conv2d_kernel, Cin=Cin, KH=KH, KW=KW, W=W)

    cost = pl.CostEstimate(
        flops=2 * N * Cout * OH * OW * KK,
        transcendentals=0,
        bytes_accessed=(x_pad.size + wb.size + N * COUT_PAD * LP) * 4,
    )

    out = pl.pallas_call(
        kernel,
        out_shape=jax.ShapeDtypeStruct((N, COUT_PAD, LP), x_nchw.dtype),
        in_specs=[
            pl.BlockSpec(memory_space=pltpu.MemorySpace.VMEM),   # image (~6 KB)
            pl.BlockSpec(memory_space=pltpu.MemorySpace.VMEM),   # weights+bias (<1 KB)
        ],
        out_specs=pl.BlockSpec(memory_space=pltpu.MemorySpace.VMEM),
        cost_estimate=cost,
    )(x_pad, wb)

    # (N, 8, OH*W) -> (N, Cout, OH, OW): free reshape + drop padded channels / junk ow.
    # Batch already leads, so no transpose and no pad on the output path.
    return out.reshape(N, COUT_PAD, OH, W)[:, :Cout, :, :OW]


if __name__ == "__main__":
    key = jax.random.PRNGKey(0)
    kx, kwt, kb = jax.random.split(key, 3)

    # Shapes implied by the module: Cin must be 3 (CIFAR-10-like input).
    N, Cin, H, W = 2, 3, 16, 16
    Cout, KH, KW = 6, 3, 3

    x = jax.random.normal(kx, (N, Cin, H, W), dtype=jnp.float32)

    # PyTorch Conv2d default init: U(-1/sqrt(fan_in), +1/sqrt(fan_in)).
    bound = 1.0 / jnp.sqrt(jnp.float32(Cin * KH * KW))
    weight = jax.random.uniform(kwt, (Cout, Cin, KH, KW), jnp.float32,
                                minval=-bound, maxval=bound)
    bias = jax.random.uniform(kb, (Cout,), jnp.float32,
                              minval=-bound, maxval=bound)

    out = jax.jit(conv2d_pallas)(x, weight, bias)
    out = jax.block_until_ready(out)
    assert out.shape == (N, Cout, H - KH + 1, W - KW + 1), out.shape

    # Cross-check against XLA's native convolution.
    ref = jax.lax.conv_general_dilated(
        x, weight, window_strides=(1, 1), padding="VALID",
        dimension_numbers=("NCHW", "OIHW", "NCHW"),
        precision=jax.lax.Precision.HIGHEST,
    ) + bias[None, :, None, None]
    assert jnp.allclose(out, ref, atol=1e-4, rtol=1e-4), \
        float(jnp.max(jnp.abs(out - ref)))

    print("KERNEL_OK")
</pallas_src>

<mosaic_0001>
module attributes {stable_mosaic.version = 11 : i64} {
  func.func @conv2d_kernel(%arg0: memref<3x2x258xf32, #tpu.memory_space<vmem>>, %arg1: memref<28x8x1xf32, #tpu.memory_space<vmem>>, %arg2: memref<2x8x224xf32, #tpu.memory_space<vmem>>) attributes {dimension_semantics = [], scalar_prefetch = 0 : i64, scratch_operands = 0 : i64, tpu.core_type = #tpu.core_type<tc>} {
    %c0 = arith.constant 0 : index
    %c0_0 = arith.constant 0 : index
    %c0_1 = arith.constant 0 : index
    %0 = vector.load %arg0[%c0, %c0_0, %c0_1] : memref<3x2x258xf32, #tpu.memory_space<vmem>>, vector<3x2x258xf32>
    %c0_2 = arith.constant 0 : index
    %c0_3 = arith.constant 0 : index
    %c0_4 = arith.constant 0 : index
    %1 = vector.load %arg1[%c0_2, %c0_3, %c0_4] : memref<28x8x1xf32, #tpu.memory_space<vmem>>, vector<28x8x1xf32>
    %2 = vector.extract_strided_slice %1 {offsets = [27, 0, 0], sizes = [1, 8, 1], strides = [1, 1, 1]} : vector<28x8x1xf32> to vector<1x8x1xf32>
    %3 = vector.shape_cast %2 : vector<1x8x1xf32> to vector<8x1xf32>
    %4 = vector.shape_cast %3 : vector<8x1xf32> to vector<1x8x1xf32>
    %5 = vector.shape_cast %4 : vector<1x8x1xf32> to vector<1x8x1xf32>
    %6 = vector.broadcast %5 : vector<1x8x1xf32> to vector<2x8x224xf32>
    %7 = vector.extract_strided_slice %0 {offsets = [0, 0, 0], sizes = [1, 2, 224], strides = [1, 1, 1]} : vector<3x2x258xf32> to vector<1x2x224xf32>
    %8 = vector.shape_cast %7 : vector<1x2x224xf32> to vector<2x224xf32>
    %9 = vector.extract_strided_slice %1 {offsets = [0, 0, 0], sizes = [1, 8, 1], strides = [1, 1, 1]} : vector<28x8x1xf32> to vector<1x8x1xf32>
    %10 = vector.shape_cast %9 : vector<1x8x1xf32> to vector<8x1xf32>
    %11 = vector.shape_cast %10 : vector<8x1xf32> to vector<1x8x1xf32>
    %12 = vector.shape_cast %8 : vector<2x224xf32> to vector<2x1x224xf32>
    %13 = vector.broadcast %11 : vector<1x8x1xf32> to vector<2x8x224xf32>
    %14 = vector.broadcast %12 : vector<2x1x224xf32> to vector<2x8x224xf32>
    %15 = arith.mulf %13, %14 : vector<2x8x224xf32>
    %16 = arith.addf %6, %15 : vector<2x8x224xf32>
    %17 = vector.extract_strided_slice %0 {offsets = [0, 0, 1], sizes = [1, 2, 224], strides = [1, 1, 1]} : vector<3x2x258xf32> to vector<1x2x224xf32>
    %18 = vector.shape_cast %17 : vector<1x2x224xf32> to vector<2x224xf32>
    %19 = vector.extract_strided_slice %1 {offsets = [1, 0, 0], sizes = [1, 8, 1], strides = [1, 1, 1]} : vector<28x8x1xf32> to vector<1x8x1xf32>
    %20 = vector.shape_cast %19 : vector<1x8x1xf32> to vector<8x1xf32>
    %21 = vector.shape_cast %20 : vector<8x1xf32> to vector<1x8x1xf32>
    %22 = vector.shape_cast %18 : vector<2x224xf32> to vector<2x1x224xf32>
    %23 = vector.broadcast %21 : vector<1x8x1xf32> to vector<2x8x224xf32>
    %24 = vector.broadcast %22 : vector<2x1x224xf32> to vector<2x8x224xf32>
    %25 = arith.mulf %23, %24 : vector<2x8x224xf32>
    %26 = arith.addf %16, %25 : vector<2x8x224xf32>
    %27 = vector.extract_strided_slice %0 {offsets = [0, 0, 2], sizes = [1, 2, 224], strides = [1, 1, 1]} : vector<3x2x258xf32> to vector<1x2x224xf32>
    %28 = vector.shape_cast %27 : vector<1x2x224xf32> to vector<2x224xf32>
    %29 = vector.extract_strided_slice %1 {offsets = [2, 0, 0], sizes = [1, 8, 1], strides = [1, 1, 1]} : vector<28x8x1xf32> to vector<1x8x1xf32>
    %30 = vector.shape_cast %29 : vector<1x8x1xf32> to vector<8x1xf32>
    %31 = vector.shape_cast %30 : vector<8x1xf32> to vector<1x8x1xf32>
    %32 = vector.shape_cast %28 : vector<2x224xf32> to vector<2x1x224xf32>
    %33 = vector.broadcast %31 : vector<1x8x1xf32> to vector<2x8x224xf32>
    %34 = vector.broadcast %32 : vector<2x1x224xf32> to vector<2x8x224xf32>
    %35 = arith.mulf %33, %34 : vector<2x8x224xf32>
    %36 = arith.addf %26, %35 : vector<2x8x224xf32>
    %37 = vector.extract_strided_slice %0 {offsets = [0, 0, 16], sizes = [1, 2, 224], strides = [1, 1, 1]} : vector<3x2x258xf32> to vector<1x2x224xf32>
    %38 = vector.shape_cast %37 : vector<1x2x224xf32> to vector<2x224xf32>
    %39 = vector.extract_strided_slice %1 {offsets = [3, 0, 0], sizes = [1, 8, 1], strides = [1, 1, 1]} : vector<28x8x1xf32> to vector<1x8x1xf32>
    %40 = vector.shape_cast %39 : vector<1x8x1xf32> to vector<8x1xf32>
    %41 = vector.shape_cast %40 : vector<8x1xf32> to vector<1x8x1xf32>
    %42 = vector.shape_cast %38 : vector<2x224xf32> to vector<2x1x224xf32>
    %43 = vector.broadcast %41 : vector<1x8x1xf32> to vector<2x8x224xf32>
    %44 = vector.broadcast %42 : vector<2x1x224xf32> to vector<2x8x224xf32>
    %45 = arith.mulf %43, %44 : vector<2x8x224xf32>
    %46 = arith.addf %36, %45 : vector<2x8x224xf32>
    %47 = vector.extract_strided_slice %0 {offsets = [0, 0, 17], sizes = [1, 2, 224], strides = [1, 1, 1]} : vector<3x2x258xf32> to vector<1x2x224xf32>
    %48 = vector.shape_cast %47 : vector<1x2x224xf32> to vector<2x224xf32>
    %49 = vector.extract_strided_slice %1 {offsets = [4, 0, 0], sizes = [1, 8, 1], strides = [1, 1, 1]} : vector<28x8x1xf32> to vector<1x8x1xf32>
    %50 = vector.shape_cast %49 : vector<1x8x1xf32> to vector<8x1xf32>
    %51 = vector.shape_cast %50 : vector<8x1xf32> to vector<1x8x1xf32>
    %52 = vector.shape_cast %48 : vector<2x224xf32> to vector<2x1x224xf32>
    %53 = vector.broadcast %51 : vector<1x8x1xf32> to vector<2x8x224xf32>
    %54 = vector.broadcast %52 : vector<2x1x224xf32> to vector<2x8x224xf32>
    %55 = arith.mulf %53, %54 : vector<2x8x224xf32>
    %56 = arith.addf %46, %55 : vector<2x8x224xf32>
    %57 = vector.extract_strided_slice %0 {offsets = [0, 0, 18], sizes = [1, 2, 224], strides = [1, 1, 1]} : vector<3x2x258xf32> to vector<1x2x224xf32>
    %58 = vector.shape_cast %57 : vector<1x2x224xf32> to vector<2x224xf32>
    %59 = vector.extract_strided_slice %1 {offsets = [5, 0, 0], sizes = [1, 8, 1], strides = [1, 1, 1]} : vector<28x8x1xf32> to vector<1x8x1xf32>
    %60 = vector.shape_cast %59 : vector<1x8x1xf32> to vector<8x1xf32>
    %61 = vector.shape_cast %60 : vector<8x1xf32> to vector<1x8x1xf32>
    %62 = vector.shape_cast %58 : vector<2x224xf32> to vector<2x1x224xf32>
    %63 = vector.broadcast %61 : vector<1x8x1xf32> to vector<2x8x224xf32>
    %64 = vector.broadcast %62 : vector<2x1x224xf32> to vector<2x8x224xf32>
    %65 = arith.mulf %63, %64 : vector<2x8x224xf32>
    %66 = arith.addf %56, %65 : vector<2x8x224xf32>
    %67 = vector.extract_strided_slice %0 {offsets = [0, 0, 32], sizes = [1, 2, 224], strides = [1, 1, 1]} : vector<3x2x258xf32> to vector<1x2x224xf32>
    %68 = vector.shape_cast %67 : vector<1x2x224xf32> to vector<2x224xf32>
    %69 = vector.extract_strided_slice %1 {offsets = [6, 0, 0], sizes = [1, 8, 1], strides = [1, 1, 1]} : vector<28x8x1xf32> to vector<1x8x1xf32>
    %70 = vector.shape_cast %69 : vector<1x8x1xf32> to vector<8x1xf32>
    %71 = vector.shape_cast %70 : vector<8x1xf32> to vector<1x8x1xf32>
    %72 = vector.shape_cast %68 : vector<2x224xf32> to vector<2x1x224xf32>
    %73 = vector.broadcast %71 : vector<1x8x1xf32> to vector<2x8x224xf32>
    %74 = vector.broadcast %72 : vector<2x1x224xf32> to vector<2x8x224xf32>
    %75 = arith.mulf %73, %74 : vector<2x8x224xf32>
    %76 = arith.addf %66, %75 : vector<2x8x224xf32>
    %77 = vector.extract_strided_slice %0 {offsets = [0, 0, 33], sizes = [1, 2, 224], strides = [1, 1, 1]} : vector<3x2x258xf32> to vector<1x2x224xf32>
    %78 = vector.shape_cast %77 : vector<1x2x224xf32> to vector<2x224xf32>
    %79 = vector.extract_strided_slice %1 {offsets = [7, 0, 0], sizes = [1, 8, 1], strides = [1, 1, 1]} : vector<28x8x1xf32> to vector<1x8x1xf32>
    %80 = vector.shape_cast %79 : vector<1x8x1xf32> to vector<8x1xf32>
    %81 = vector.shape_cast %80 : vector<8x1xf32> to vector<1x8x1xf32>
    %82 = vector.shape_cast %78 : vector<2x224xf32> to vector<2x1x224xf32>
    %83 = vector.broadcast %81 : vector<1x8x1xf32> to vector<2x8x224xf32>
    %84 = vector.broadcast %82 : vector<2x1x224xf32> to vector<2x8x224xf32>
    %85 = arith.mulf %83, %84 : vector<2x8x224xf32>
    %86 = arith.addf %76, %85 : vector<2x8x224xf32>
    %87 = vector.extract_strided_slice %0 {offsets = [0, 0, 34], sizes = [1, 2, 224], strides = [1, 1, 1]} : vector<3x2x258xf32> to vector<1x2x224xf32>
    %88 = vector.shape_cast %87 : vector<1x2x224xf32> to vector<2x224xf32>
    %89 = vector.extract_strided_slice %1 {offsets = [8, 0, 0], sizes = [1, 8, 1], strides = [1, 1, 1]} : vector<28x8x1xf32> to vector<1x8x1xf32>
    %90 = vector.shape_cast %89 : vector<1x8x1xf32> to vector<8x1xf32>
    %91 = vector.shape_cast %90 : vector<8x1xf32> to vector<1x8x1xf32>
    %92 = vector.shape_cast %88 : vector<2x224xf32> to vector<2x1x224xf32>
    %93 = vector.broadcast %91 : vector<1x8x1xf32> to vector<2x8x224xf32>
    %94 = vector.broadcast %92 : vector<2x1x224xf32> to vector<2x8x224xf32>
    %95 = arith.mulf %93, %94 : vector<2x8x224xf32>
    %96 = arith.addf %86, %95 : vector<2x8x224xf32>
    %97 = vector.extract_strided_slice %0 {offsets = [1, 0, 0], sizes = [1, 2, 224], strides = [1, 1, 1]} : vector<3x2x258xf32> to vector<1x2x224xf32>
    %98 = vector.shape_cast %97 : vector<1x2x224xf32> to vector<2x224xf32>
    %99 = vector.extract_strided_slice %1 {offsets = [9, 0, 0], sizes = [1, 8, 1], strides = [1, 1, 1]} : vector<28x8x1xf32> to vector<1x8x1xf32>
    %100 = vector.shape_cast %99 : vector<1x8x1xf32> to vector<8x1xf32>
    %101 = vector.shape_cast %100 : vector<8x1xf32> to vector<1x8x1xf32>
    %102 = vector.shape_cast %98 : vector<2x224xf32> to vector<2x1x224xf32>
    %103 = vector.broadcast %101 : vector<1x8x1xf32> to vector<2x8x224xf32>
    %104 = vector.broadcast %102 : vector<2x1x224xf32> to vector<2x8x224xf32>
    %105 = arith.mulf %103, %104 : vector<2x8x224xf32>
    %106 = arith.addf %96, %105 : vector<2x8x224xf32>
    %107 = vector.extract_strided_slice %0 {offsets = [1, 0, 1], sizes = [1, 2, 224], strides = [1, 1, 1]} : vector<3x2x258xf32> to vector<1x2x224xf32>
    %108 = vector.shape_cast %107 : vector<1x2x224xf32> to vector<2x224xf32>
    %109 = vector.extract_strided_slice %1 {offsets = [10, 0, 0], sizes = [1, 8, 1], strides = [1, 1, 1]} : vector<28x8x1xf32> to vector<1x8x1xf32>
    %110 = vector.shape_cast %109 : vector<1x8x1xf32> to vector<8x1xf32>
    %111 = vector.shape_cast %110 : vector<8x1xf32> to vector<1x8x1xf32>
    %112 = vector.shape_cast %108 : vector<2x224xf32> to vector<2x1x224xf32>
    %113 = vector.broadcast %111 : vector<1x8x1xf32> to vector<2x8x224xf32>
    %114 = vector.broadcast %112 : vector<2x1x224xf32> to vector<2x8x224xf32>
    %115 = arith.mulf %113, %114 : vector<2x8x224xf32>
    %116 = arith.addf %106, %115 : vector<2x8x224xf32>
    %117 = vector.extract_strided_slice %0 {offsets = [1, 0, 2], sizes = [1, 2, 224], strides = [1, 1, 1]} : vector<3x2x258xf32> to vector<1x2x224xf32>
    %118 = vector.shape_cast %117 : vector<1x2x224xf32> to vector<2x224xf32>
    %119 = vector.extract_strided_slice %1 {offsets = [11, 0, 0], sizes = [1, 8, 1], strides = [1, 1, 1]} : vector<28x8x1xf32> to vector<1x8x1xf32>
    %120 = vector.shape_cast %119 : vector<1x8x1xf32> to vector<8x1xf32>
    %121 = vector.shape_cast %120 : vector<8x1xf32> to vector<1x8x1xf32>
    %122 = vector.shape_cast %118 : vector<2x224xf32> to vector<2x1x224xf32>
    %123 = vector.broadcast %121 : vector<1x8x1xf32> to vector<2x8x224xf32>
    %124 = vector.broadcast %122 : vector<2x1x224xf32> to vector<2x8x224xf32>
    %125 = arith.mulf %123, %124 : vector<2x8x224xf32>
    %126 = arith.addf %116, %125 : vector<2x8x224xf32>
    %127 = vector.extract_strided_slice %0 {offsets = [1, 0, 16], sizes = [1, 2, 224], strides = [1, 1, 1]} : vector<3x2x258xf32> to vector<1x2x224xf32>
    %128 = vector.shape_cast %127 : vector<1x2x224xf32> to vector<2x224xf32>
    %129 = vector.extract_strided_slice %1 {offsets = [12, 0, 0], sizes = [1, 8, 1], strides = [1, 1, 1]} : vector<28x8x1xf32> to vector<1x8x1xf32>
    %130 = vector.shape_cast %129 : vector<1x8x1xf32> to vector<8x1xf32>
    %131 = vector.shape_cast %130 : vector<8x1xf32> to vector<1x8x1xf32>
    %132 = vector.shape_cast %128 : vector<2x224xf32> to vector<2x1x224xf32>
    %133 = vector.broadcast %131 : vector<1x8x1xf32> to vector<2x8x224xf32>
    %134 = vector.broadcast %132 : vector<2x1x224xf32> to vector<2x8x224xf32>
    %135 = arith.mulf %133, %134 : vector<2x8x224xf32>
    %136 = arith.addf %126, %135 : vector<2x8x224xf32>
    %137 = vector.extract_strided_slice %0 {offsets = [1, 0, 17], sizes = [1, 2, 224], strides = [1, 1, 1]} : vector<3x2x258xf32> to vector<1x2x224xf32>
    %138 = vector.shape_cast %137 : vector<1x2x224xf32> to vector<2x224xf32>
    %139 = vector.extract_strided_slice %1 {offsets = [13, 0, 0], sizes = [1, 8, 1], strides = [1, 1, 1]} : vector<28x8x1xf32> to vector<1x8x1xf32>
    %140 = vector.shape_cast %139 : vector<1x8x1xf32> to vector<8x1xf32>
    %141 = vector.shape_cast %140 : vector<8x1xf32> to vector<1x8x1xf32>
    %142 = vector.shape_cast %138 : vector<2x224xf32> to vector<2x1x224xf32>
    %143 = vector.broadcast %141 : vector<1x8x1xf32> to vector<2x8x224xf32>
    %144 = vector.broadcast %142 : vector<2x1x224xf32> to vector<2x8x224xf32>
    %145 = arith.mulf %143, %144 : vector<2x8x224xf32>
    %146 = arith.addf %136, %145 : vector<2x8x224xf32>
    %147 = vector.extract_strided_slice %0 {offsets = [1, 0, 18], sizes = [1, 2, 224], strides = [1, 1, 1]} : vector<3x2x258xf32> to vector<1x2x224xf32>
    %148 = vector.shape_cast %147 : vector<1x2x224xf32> to vector<2x224xf32>
    %149 = vector.extract_strided_slice %1 {offsets = [14, 0, 0], sizes = [1, 8, 1], strides = [1, 1, 1]} : vector<28x8x1xf32> to vector<1x8x1xf32>
    %150 = vector.shape_cast %149 : vector<1x8x1xf32> to vector<8x1xf32>
    %151 = vector.shape_cast %150 : vector<8x1xf32> to vector<1x8x1xf32>
    %152 = vector.shape_cast %148 : vector<2x224xf32> to vector<2x1x224xf32>
    %153 = vector.broadcast %151 : vector<1x8x1xf32> to vector<2x8x224xf32>
    %154 = vector.broadcast %152 : vector<2x1x224xf32> to vector<2x8x224xf32>
    %155 = arith.mulf %153, %154 : vector<2x8x224xf32>
    %156 = arith.addf %146, %155 : vector<2x8x224xf32>
    %157 = vector.extract_strided_slice %0 {offsets = [1, 0, 32], sizes = [1, 2, 224], strides = [1, 1, 1]} : vector<3x2x258xf32> to vector<1x2x224xf32>
    %158 = vector.shape_cast %157 : vector<1x2x224xf32> to vector<2x224xf32>
    %159 = vector.extract_strided_slice %1 {offsets = [15, 0, 0], sizes = [1, 8, 1], strides = [1, 1, 1]} : vector<28x8x1xf32> to vector<1x8x1xf32>
    %160 = vector.shape_cast %159 : vector<1x8x1xf32> to vector<8x1xf32>
    %161 = vector.shape_cast %160 : vector<8x1xf32> to vector<1x8x1xf32>
    %162 = vector.shape_cast %158 : vector<2x224xf32> to vector<2x1x224xf32>
    %163 = vector.broadcast %161 : vector<1x8x1xf32> to vector<2x8x224xf32>
    %164 = vector.broadcast %162 : vector<2x1x224xf32> to vector<2x8x224xf32>
    %165 = arith.mulf %163, %164 : vector<2x8x224xf32>
    %166 = arith.addf %156, %165 : vector<2x8x224xf32>
    %167 = vector.extract_strided_slice %0 {offsets = [1, 0, 33], sizes = [1, 2, 224], strides = [1, 1, 1]} : vector<3x2x258xf32> to vector<1x2x224xf32>
    %168 = vector.shape_cast %167 : vector<1x2x224xf32> to vector<2x224xf32>
    %169 = vector.extract_strided_slice %1 {offsets = [16, 0, 0], sizes = [1, 8, 1], strides = [1, 1, 1]} : vector<28x8x1xf32> to vector<1x8x1xf32>
    %170 = vector.shape_cast %169 : vector<1x8x1xf32> to vector<8x1xf32>
    %171 = vector.shape_cast %170 : vector<8x1xf32> to vector<1x8x1xf32>
    %172 = vector.shape_cast %168 : vector<2x224xf32> to vector<2x1x224xf32>
    %173 = vector.broadcast %171 : vector<1x8x1xf32> to vector<2x8x224xf32>
    %174 = vector.broadcast %172 : vector<2x1x224xf32> to vector<2x8x224xf32>
    %175 = arith.mulf %173, %174 : vector<2x8x224xf32>
    %176 = arith.addf %166, %175 : vector<2x8x224xf32>
    %177 = vector.extract_strided_slice %0 {offsets = [1, 0, 34], sizes = [1, 2, 224], strides = [1, 1, 1]} : vector<3x2x258xf32> to vector<1x2x224xf32>
    %178 = vector.shape_cast %177 : vector<1x2x224xf32> to vector<2x224xf32>
    %179 = vector.extract_strided_slice %1 {offsets = [17, 0, 0], sizes = [1, 8, 1], strides = [1, 1, 1]} : vector<28x8x1xf32> to vector<1x8x1xf32>
    %180 = vector.shape_cast %179 : vector<1x8x1xf32> to vector<8x1xf32>
    %181 = vector.shape_cast %180 : vector<8x1xf32> to vector<1x8x1xf32>
    %182 = vector.shape_cast %178 : vector<2x224xf32> to vector<2x1x224xf32>
    %183 = vector.broadcast %181 : vector<1x8x1xf32> to vector<2x8x224xf32>
    %184 = vector.broadcast %182 : vector<2x1x224xf32> to vector<2x8x224xf32>
    %185 = arith.mulf %183, %184 : vector<2x8x224xf32>
    %186 = arith.addf %176, %185 : vector<2x8x224xf32>
    %187 = vector.extract_strided_slice %0 {offsets = [2, 0, 0], sizes = [1, 2, 224], strides = [1, 1, 1]} : vector<3x2x258xf32> to vector<1x2x224xf32>
    %188 = vector.shape_cast %187 : vector<1x2x224xf32> to vector<2x224xf32>
    %189 = vector.extract_strided_slice %1 {offsets = [18, 0, 0], sizes = [1, 8, 1], strides = [1, 1, 1]} : vector<28x8x1xf32> to vector<1x8x1xf32>
    %190 = vector.shape_cast %189 : vector<1x8x1xf32> to vector<8x1xf32>
    %191 = vector.shape_cast %190 : vector<8x1xf32> to vector<1x8x1xf32>
    %192 = vector.shape_cast %188 : vector<2x224xf32> to vector<2x1x224xf32>
    %193 = vector.broadcast %191 : vector<1x8x1xf32> to vector<2x8x224xf32>
    %194 = vector.broadcast %192 : vector<2x1x224xf32> to vector<2x8x224xf32>
    %195 = arith.mulf %193, %194 : vector<2x8x224xf32>
    %196 = arith.addf %186, %195 : vector<2x8x224xf32>
    %197 = vector.extract_strided_slice %0 {offsets = [2, 0, 1], sizes = [1, 2, 224], strides = [1, 1, 1]} : vector<3x2x258xf32> to vector<1x2x224xf32>
    %198 = vector.shape_cast %197 : vector<1x2x224xf32> to vector<2x224xf32>
    %199 = vector.extract_strided_slice %1 {offsets = [19, 0, 0], sizes = [1, 8, 1], strides = [1, 1, 1]} : vector<28x8x1xf32> to vector<1x8x1xf32>
    %200 = vector.shape_cast %199 : vector<1x8x1xf32> to vector<8x1xf32>
    %201 = vector.shape_cast %200 : vector<8x1xf32> to vector<1x8x1xf32>
    %202 = vector.shape_cast %198 : vector<2x224xf32> to vector<2x1x224xf32>
    %203 = vector.broadcast %201 : vector<1x8x1xf32> to vector<2x8x224xf32>
    %204 = vector.broadcast %202 : vector<2x1x224xf32> to vector<2x8x224xf32>
    %205 = arith.mulf %203, %204 : vector<2x8x224xf32>
    %206 = arith.addf %196, %205 : vector<2x8x224xf32>
    %207 = vector.extract_strided_slice %0 {offsets = [2, 0, 2], sizes = [1, 2, 224], strides = [1, 1, 1]} : vector<3x2x258xf32> to vector<1x2x224xf32>
    %208 = vector.shape_cast %207 : vector<1x2x224xf32> to vector<2x224xf32>
    %209 = vector.extract_strided_slice %1 {offsets = [20, 0, 0], sizes = [1, 8, 1], strides = [1, 1, 1]} : vector<28x8x1xf32> to vector<1x8x1xf32>
    %210 = vector.shape_cast %209 : vector<1x8x1xf32> to vector<8x1xf32>
    %211 = vector.shape_cast %210 : vector<8x1xf32> to vector<1x8x1xf32>
    %212 = vector.shape_cast %208 : vector<2x224xf32> to vector<2x1x224xf32>
    %213 = vector.broadcast %211 : vector<1x8x1xf32> to vector<2x8x224xf32>
    %214 = vector.broadcast %212 : vector<2x1x224xf32> to vector<2x8x224xf32>
    %215 = arith.mulf %213, %214 : vector<2x8x224xf32>
    %216 = arith.addf %206, %215 : vector<2x8x224xf32>
    %217 = vector.extract_strided_slice %0 {offsets = [2, 0, 16], sizes = [1, 2, 224], strides = [1, 1, 1]} : vector<3x2x258xf32> to vector<1x2x224xf32>
    %218 = vector.shape_cast %217 : vector<1x2x224xf32> to vector<2x224xf32>
    %219 = vector.extract_strided_slice %1 {offsets = [21, 0, 0], sizes = [1, 8, 1], strides = [1, 1, 1]} : vector<28x8x1xf32> to vector<1x8x1xf32>
    %220 = vector.shape_cast %219 : vector<1x8x1xf32> to vector<8x1xf32>
    %221 = vector.shape_cast %220 : vector<8x1xf32> to vector<1x8x1xf32>
    %222 = vector.shape_cast %218 : vector<2x224xf32> to vector<2x1x224xf32>
    %223 = vector.broadcast %221 : vector<1x8x1xf32> to vector<2x8x224xf32>
    %224 = vector.broadcast %222 : vector<2x1x224xf32> to vector<2x8x224xf32>
    %225 = arith.mulf %223, %224 : vector<2x8x224xf32>
    %226 = arith.addf %216, %225 : vector<2x8x224xf32>
    %227 = vector.extract_strided_slice %0 {offsets = [2, 0, 17], sizes = [1, 2, 224], strides = [1, 1, 1]} : vector<3x2x258xf32> to vector<1x2x224xf32>
    %228 = vector.shape_cast %227 : vector<1x2x224xf32> to vector<2x224xf32>
    %229 = vector.extract_strided_slice %1 {offsets = [22, 0, 0], sizes = [1, 8, 1], strides = [1, 1, 1]} : vector<28x8x1xf32> to vector<1x8x1xf32>
    %230 = vector.shape_cast %229 : vector<1x8x1xf32> to vector<8x1xf32>
    %231 = vector.shape_cast %230 : vector<8x1xf32> to vector<1x8x1xf32>
    %232 = vector.shape_cast %228 : vector<2x224xf32> to vector<2x1x224xf32>
    %233 = vector.broadcast %231 : vector<1x8x1xf32> to vector<2x8x224xf32>
    %234 = vector.broadcast %232 : vector<2x1x224xf32> to vector<2x8x224xf32>
    %235 = arith.mulf %233, %234 : vector<2x8x224xf32>
    %236 = arith.addf %226, %235 : vector<2x8x224xf32>
    %237 = vector.extract_strided_slice %0 {offsets = [2, 0, 18], sizes = [1, 2, 224], strides = [1, 1, 1]} : vector<3x2x258xf32> to vector<1x2x224xf32>
    %238 = vector.shape_cast %237 : vector<1x2x224xf32> to vector<2x224xf32>
    %239 = vector.extract_strided_slice %1 {offsets = [23, 0, 0], sizes = [1, 8, 1], strides = [1, 1, 1]} : vector<28x8x1xf32> to vector<1x8x1xf32>
    %240 = vector.shape_cast %239 : vector<1x8x1xf32> to vector<8x1xf32>
    %241 = vector.shape_cast %240 : vector<8x1xf32> to vector<1x8x1xf32>
    %242 = vector.shape_cast %238 : vector<2x224xf32> to vector<2x1x224xf32>
    %243 = vector.broadcast %241 : vector<1x8x1xf32> to vector<2x8x224xf32>
    %244 = vector.broadcast %242 : vector<2x1x224xf32> to vector<2x8x224xf32>
    %245 = arith.mulf %243, %244 : vector<2x8x224xf32>
    %246 = arith.addf %236, %245 : vector<2x8x224xf32>
    %247 = vector.extract_strided_slice %0 {offsets = [2, 0, 32], sizes = [1, 2, 224], strides = [1, 1, 1]} : vector<3x2x258xf32> to vector<1x2x224xf32>
    %248 = vector.shape_cast %247 : vector<1x2x224xf32> to vector<2x224xf32>
    %249 = vector.extract_strided_slice %1 {offsets = [24, 0, 0], sizes = [1, 8, 1], strides = [1, 1, 1]} : vector<28x8x1xf32> to vector<1x8x1xf32>
    %250 = vector.shape_cast %249 : vector<1x8x1xf32> to vector<8x1xf32>
    %251 = vector.shape_cast %250 : vector<8x1xf32> to vector<1x8x1xf32>
    %252 = vector.shape_cast %248 : vector<2x224xf32> to vector<2x1x224xf32>
    %253 = vector.broadcast %251 : vector<1x8x1xf32> to vector<2x8x224xf32>
    %254 = vector.broadcast %252 : vector<2x1x224xf32> to vector<2x8x224xf32>
    %255 = arith.mulf %253, %254 : vector<2x8x224xf32>
    %256 = arith.addf %246, %255 : vector<2x8x224xf32>
    %257 = vector.extract_strided_slice %0 {offsets = [2, 0, 33], sizes = [1, 2, 224], strides = [1, 1, 1]} : vector<3x2x258xf32> to vector<1x2x224xf32>
    %258 = vector.shape_cast %257 : vector<1x2x224xf32> to vector<2x224xf32>
    %259 = vector.extract_strided_slice %1 {offsets = [25, 0, 0], sizes = [1, 8, 1], strides = [1, 1, 1]} : vector<28x8x1xf32> to vector<1x8x1xf32>
    %260 = vector.shape_cast %259 : vector<1x8x1xf32> to vector<8x1xf32>
    %261 = vector.shape_cast %260 : vector<8x1xf32> to vector<1x8x1xf32>
    %262 = vector.shape_cast %258 : vector<2x224xf32> to vector<2x1x224xf32>
    %263 = vector.broadcast %261 : vector<1x8x1xf32> to vector<2x8x224xf32>
    %264 = vector.broadcast %262 : vector<2x1x224xf32> to vector<2x8x224xf32>
    %265 = arith.mulf %263, %264 : vector<2x8x224xf32>
    %266 = arith.addf %256, %265 : vector<2x8x224xf32>
    %267 = vector.extract_strided_slice %0 {offsets = [2, 0, 34], sizes = [1, 2, 224], strides = [1, 1, 1]} : vector<3x2x258xf32> to vector<1x2x224xf32>
    %268 = vector.shape_cast %267 : vector<1x2x224xf32> to vector<2x224xf32>
    %269 = vector.extract_strided_slice %1 {offsets = [26, 0, 0], sizes = [1, 8, 1], strides = [1, 1, 1]} : vector<28x8x1xf32> to vector<1x8x1xf32>
    %270 = vector.shape_cast %269 : vector<1x8x1xf32> to vector<8x1xf32>
    %271 = vector.shape_cast %270 : vector<8x1xf32> to vector<1x8x1xf32>
    %272 = vector.shape_cast %268 : vector<2x224xf32> to vector<2x1x224xf32>
    %273 = vector.broadcast %271 : vector<1x8x1xf32> to vector<2x8x224xf32>
    %274 = vector.broadcast %272 : vector<2x1x224xf32> to vector<2x8x224xf32>
    %275 = arith.mulf %273, %274 : vector<2x8x224xf32>
    %276 = arith.addf %266, %275 : vector<2x8x224xf32>
    %c0_5 = arith.constant 0 : index
    %c0_6 = arith.constant 0 : index
    %c0_7 = arith.constant 0 : index
    %277 = vector.load %arg2[%c0_5, %c0_6, %c0_7] : memref<2x8x224xf32, #tpu.memory_space<vmem>>, vector<2x8x224xf32>
    tpu.vector_store %arg2[%c0_5, %c0_6, %c0_7], %276 {strides = array<i32>} : memref<2x8x224xf32, #tpu.memory_space<vmem>>, vector<2x8x224xf32>,
    return
  }
}

</mosaic_0001>

<llo_original>
// kernel: conv2d_pallas.1
$region0: #{conv2d_pallas.1}
  #allocation0 [shape = 'u32[]', space=smem, size = 0x4, offset = 0x4, fixed_abs, tag = 'smem constant byte address 0x4 - core index']
  #allocation1 [shape = 'u32[144,128]{1,0:T(1,128)}', space=vmem, size = 0x12000, scoped, tag = 'internal scratch']
  %s0 = inlined_call_operand.vmem [shape: f32[3,2,258], index: 0, kind: input, shape index: {}]
  %s1 = inlined_call_operand.vmem [shape: f32[28,8,1], index: 1, kind: input, shape index: {}]
  %s2 = inlined_call_operand.vmem [shape: f32[2,8,224], index: 2, kind: output, shape index: {}]
  %s3 = sld [smem:[#allocation0]]
  $region18: #{conv2d_pallas.1} parent=0
    _
  %s5 = ssub.s32 1, %s3
  %s6 = scalar_select 0, %s5, %s3
  // Predicated region
  $region2: #{conv2d_pallas.1} parent=0 // pred_check
    _
  $region3: #{conv2d_pallas.1} parent=0 // pred_check_branch
    %8 = sbr.rel (0) target = $region5
  $region4: #{conv2d_pallas.1} parent=0 // pred_region
    _
  $region5: #{conv2d_pallas.1} parent=0 // pred_fallthru
    _
  // Predicated region
  $region6: #{conv2d_pallas.1} parent=0 // pred_check
    _
  $region7: #{conv2d_pallas.1} parent=0 // pred_check_branch
    %10 = sbr.rel (0) target = $region9
  $region8: #{conv2d_pallas.1} parent=0 // pred_region
    _
  $region9: #{conv2d_pallas.1} parent=0 // pred_fallthru
    _
  %v11 = vld [vmem:[%s0] sm:$0x3f]
  %v12 = vld [vmem:[%s0 + $0x6] sm:$0x3f]
  %v13 = vld [vmem:[%s0 + $0xc] sm:$0x3f]
  %v14 = vld [vmem:[%s1] sm:$0xff]
  %v15 = vld [vmem:[%s1 + $0x8] sm:$0xff]
  %v16 = vld [vmem:[%s1 + $0x10] sm:$0xff]
  %v17 = vld [vmem:[%s1 + $0x18] sm:$0xff]
  %v18 = vld [vmem:[%s1 + $0x20] sm:$0xff]
  %v19 = vld [vmem:[%s1 + $0x28] sm:$0xff]
  %v20 = vld [vmem:[%s1 + $0x30] sm:$0xff]
  %v21 = vld [vmem:[%s1 + $0x38] sm:$0xff]
  %v22 = vld [vmem:[%s1 + $0x40] sm:$0xff]
  %v23 = vld [vmem:[%s1 + $0x48] sm:$0xff]
  %v24 = vld [vmem:[%s1 + $0x50] sm:$0xff]
  %v25 = vld [vmem:[%s1 + $0x58] sm:$0xff]
  %v26 = vld [vmem:[%s1 + $0x60] sm:$0xff]
  %v27 = vld [vmem:[%s1 + $0x68] sm:$0xff]
  %v28 = vld [vmem:[%s1 + $0x70] sm:$0xff]
  %v29 = vld [vmem:[%s1 + $0x78] sm:$0xff]
  %v30 = vld [vmem:[%s1 + $0x80] sm:$0xff]
  %v31 = vld [vmem:[%s1 + $0x88] sm:$0xff]
  %v32 = vld [vmem:[%s1 + $0x90] sm:$0xff]
  %v33 = vld [vmem:[%s1 + $0x98] sm:$0xff]
  %v34 = vld [vmem:[%s1 + $0xa0] sm:$0xff]
  %v35 = vld [vmem:[%s1 + $0xa8] sm:$0xff]
  %v36 = vld [vmem:[%s1 + $0xb0] sm:$0xff]
  %v37 = vld [vmem:[%s1 + $0xb8] sm:$0xff]
  %v38 = vld [vmem:[%s1 + $0xc0] sm:$0xff]
  %v39 = vld [vmem:[%s1 + $0xc8] sm:$0xff]
  %v40 = vld [vmem:[%s1 + $0xd0] sm:$0xff]
  %v41 = vld [vmem:[%s1 + $0xd8] sm:$0xff]
  %43 = vset.pattern.permute.xlu0 0
  %44 = vperm.xlu0 %43, %v41
  %v45 = vpop.permute.xlu0 %44
  %v49 = vunpack.c.l.s4 1966171168
  %v50 = vunpack.c.0.s8 %v49
  %v51 = vlaneseq
  %v52 = vshrl.u32 %v51, 7
  %v53 = vsub.s32 %v50, %v52
  %v54 = vrot.slane %v11, %v53
  %v55 = vcombine.high %v54, %v54
  %57 = vset.pattern.permute.xlu0 0
  %58 = vperm.xlu0 %57, %v14
  %v59 = vpop.permute.xlu0 %58
  %v61 = vlaneseq
  %v62 = vshrl.u32 %v61, 7
  %v63 = vsub.s32 0, %v62
  %v64 = vrot.slane %v54, %v63
  %v65 = vlaneseq
  %v66 = vshrl.u32 %v65, 7
  %v67 = vsub.s32 1, %v66
  %v68 = vrot.slane %v54, %v67
  %v69 = vlaneseq
  %v70 = vshrl.u32 %v69, 7
  %v71 = vsub.s32 0, %v70
  %v72 = vrot.slane %v55, %v71
  %v73 = vlaneseq
  %v74 = vshrl.u32 %v73, 7
  %v75 = vsub.s32 1, %v74
  %v76 = vrot.slane %v55, %v75
  %v81 = vmul.f32 %v59, %v64
  %v82 = vmul.f32 %v59, %v68
  %v83 = vmul.f32 %v59, %v72
  %v84 = vmul.f32 %v59, %v76
  %v85 = vadd.f32 %v45, %v81
  %v86 = vadd.f32 %v45, %v82
  %v87 = vadd.f32 %v45, %v83
  %v88 = vadd.f32 %v45, %v84
  %90 = vset.pattern.permute.xlu0 0
  %91 = vperm.xlu0 %90, %v15
  %v92 = vpop.permute.xlu0 %91
  %v94 = vmul.f32 %v92, %v64
  %v95 = vmul.f32 %v92, %v68
  %v96 = vmul.f32 %v92, %v72
  %v97 = vmul.f32 %v92, %v76
  %102 = vrot.lane.b32.xlu0 %v94, 127
  %v103 = vpop.permute.xlu0 %102
  %104 = vrot.lane.b32.xlu0 %v95, 127
  %v105 = vpop.permute.xlu0 %104
  %106 = vrot.lane.b32.xlu0 %v96, 127
  %v107 = vpop.permute.xlu0 %106
  %108 = vrot.lane.b32.xlu0 %v97, 127
  %v109 = vpop.permute.xlu0 %108
  %vm110 = vcmask 1039360
  %v111 = vsel %vm110, %v103, %v105
  %v112 = vsel %vm110, %v107, %v109
  %v117 = vadd.f32 %v85, %v111
  %v118 = vadd.f32 %v86, %v105
  %v119 = vadd.f32 %v87, %v112
  %v120 = vadd.f32 %v88, %v109
  %122 = vset.pattern.permute.xlu0 0
  %123 = vperm.xlu0 %122, %v16
  %v124 = vpop.permute.xlu0 %123
  %v126 = vmul.f32 %v124, %v64
  %v127 = vmul.f32 %v124, %v68
  %v128 = vmul.f32 %v124, %v72
  %v129 = vmul.f32 %v124, %v76
  %134 = vrot.lane.b32.xlu0 %v126, 126
  %v135 = vpop.permute.xlu0 %134
  %136 = vrot.lane.b32.xlu0 %v127, 126
  %v137 = vpop.permute.xlu0 %136
  %138 = vrot.lane.b32.xlu0 %v128, 126
  %v139 = vpop.permute.xlu0 %138
  %140 = vrot.lane.b32.xlu0 %v129, 126
  %v141 = vpop.permute.xlu0 %140
  %vm142 = vcmask 1031168
  %v143 = vsel %vm142, %v135, %v137
  %v144 = vsel %vm142, %v139, %v141
  %v149 = vadd.f32 %v117, %v143
  %v150 = vadd.f32 %v118, %v137
  %v151 = vadd.f32 %v119, %v144
  %v152 = vadd.f32 %v120, %v141
  %154 = vset.pattern.permute.xlu0 0
  %155 = vperm.xlu0 %154, %v17
  %v156 = vpop.permute.xlu0 %155
  %v158 = vmul.f32 %v156, %v64
  %v159 = vmul.f32 %v156, %v68
  %v160 = vmul.f32 %v156, %v72
  %v161 = vmul.f32 %v156, %v76
  %166 = vrot.lane.b32.xlu0 %v158, 112
  %v167 = vpop.permute.xlu0 %166
  %168 = vrot.lane.b32.xlu0 %v159, 112
  %v169 = vpop.permute.xlu0 %168
  %170 = vrot.lane.b32.xlu0 %v160, 112
  %v171 = vpop.permute.xlu0 %170
  %172 = vrot.lane.b32.xlu0 %v161, 112
  %v173 = vpop.permute.xlu0 %172
  %vm174 = vcmask 916480
  %v175 = vsel %vm174, %v167, %v169
  %v176 = vsel %vm174, %v171, %v173
  %v181 = vadd.f32 %v149, %v175
  %v182 = vadd.f32 %v150, %v169
  %v183 = vadd.f32 %v151, %v176
  %v184 = vadd.f32 %v152, %v173
  %186 = vset.pattern.permute.xlu0 0
  %187 = vperm.xlu0 %186, %v18
  %v188 = vpop.permute.xlu0 %187
  %v190 = vmul.f32 %v188, %v64
  %v191 = vmul.f32 %v188, %v68
  %v192 = vmul.f32 %v188, %v72
  %v193 = vmul.f32 %v188, %v76
  %198 = vrot.lane.b32.xlu0 %v190, 111
  %v199 = vpop.permute.xlu0 %198
  %200 = vrot.lane.b32.xlu0 %v191, 111
  %v201 = vpop.permute.xlu0 %200
  %202 = vrot.lane.b32.xlu0 %v192, 111
  %v203 = vpop.permute.xlu0 %202
  %204 = vrot.lane.b32.xlu0 %v193, 111
  %v205 = vpop.permute.xlu0 %204
  %vm206 = vcmask 908288
  %v207 = vsel %vm206, %v199, %v201
  %v208 = vsel %vm206, %v203, %v205
  %v213 = vadd.f32 %v181, %v207
  %v214 = vadd.f32 %v182, %v201
  %v215 = vadd.f32 %v183, %v208
  %v216 = vadd.f32 %v184, %v205
  %218 = vset.pattern.permute.xlu0 0
  %219 = vperm.xlu0 %218, %v19
  %v220 = vpop.permute.xlu0 %219
  %v222 = vmul.f32 %v220, %v64
  %v223 = vmul.f32 %v220, %v68
  %v224 = vmul.f32 %v220, %v72
  %v225 = vmul.f32 %v220, %v76
  %230 = vrot.lane.b32.xlu0 %v222, 110
  %v231 = vpop.permute.xlu0 %230
  %232 = vrot.lane.b32.xlu0 %v223, 110
  %v233 = vpop.permute.xlu0 %232
  %234 = vrot.lane.b32.xlu0 %v224, 110
  %v235 = vpop.permute.xlu0 %234
  %236 = vrot.lane.b32.xlu0 %v225, 110
  %v237 = vpop.permute.xlu0 %236
  %vm238 = vcmask 900096
  %v239 = vsel %vm238, %v231, %v233
  %v240 = vsel %vm238, %v235, %v237
  %v245 = vadd.f32 %v213, %v239
  %v246 = vadd.f32 %v214, %v233
  %v247 = vadd.f32 %v215, %v240
  %v248 = vadd.f32 %v216, %v237
  %250 = vset.pattern.permute.xlu0 0
  %251 = vperm.xlu0 %250, %v20
  %v252 = vpop.permute.xlu0 %251
  %v254 = vmul.f32 %v252, %v64
  %v255 = vmul.f32 %v252, %v68
  %v256 = vmul.f32 %v252, %v72
  %v257 = vmul.f32 %v252, %v76
  %262 = vrot.lane.b32.xlu0 %v254, 96
  %v263 = vpop.permute.xlu0 %262
  %264 = vrot.lane.b32.xlu0 %v255, 96
  %v265 = vpop.permute.xlu0 %264
  %266 = vrot.lane.b32.xlu0 %v256, 96
  %v267 = vpop.permute.xlu0 %266
  %268 = vrot.lane.b32.xlu0 %v257, 96
  %v269 = vpop.permute.xlu0 %268
  %vm270 = vcmask 785408
  %v271 = vsel %vm270, %v263, %v265
  %v272 = vsel %vm270, %v267, %v269
  %v277 = vadd.f32 %v245, %v271
  %v278 = vadd.f32 %v246, %v265
  %v279 = vadd.f32 %v247, %v272
  %v280 = vadd.f32 %v248, %v269
  %282 = vset.pattern.permute.xlu0 0
  %283 = vperm.xlu0 %282, %v21
  %v284 = vpop.permute.xlu0 %283
  %v286 = vlaneseq
  %v287 = vshrl.u32 %v286, 7
  %v288 = vsub.s32 2, %v287
  %v289 = vrot.slane %v54, %v288
  %v290 = vlaneseq
  %v291 = vshrl.u32 %v290, 7
  %v292 = vsub.s32 2, %v291
  %v293 = vrot.slane %v55, %v292
  %v296 = vmul.f32 %v284, %v64
  %v297 = vmul.f32 %v284, %v68
  %v298 = vmul.f32 %v284, %v289
  %v299 = vmul.f32 %v284, %v72
  %v300 = vmul.f32 %v284, %v76
  %v301 = vmul.f32 %v284, %v293
  %308 = vrot.lane.b32.xlu0 %v296, 95
  %v309 = vpop.permute.xlu0 %308
  %310 = vrot.lane.b32.xlu0 %v297, 95
  %v311 = vpop.permute.xlu0 %310
  %312 = vrot.lane.b32.xlu0 %v298, 95
  %v313 = vpop.permute.xlu0 %312
  %314 = vrot.lane.b32.xlu0 %v299, 95
  %v315 = vpop.permute.xlu0 %314
  %316 = vrot.lane.b32.xlu0 %v300, 95
  %v317 = vpop.permute.xlu0 %316
  %318 = vrot.lane.b32.xlu0 %v301, 95
  %v319 = vpop.permute.xlu0 %318
  %vm320 = vcmask 777216
  %v321 = vsel %vm320, %v309, %v311
  %v322 = vsel %vm320, %v311, %v313
  %v323 = vsel %vm320, %v315, %v317
  %v324 = vsel %vm320, %v317, %v319
  %v329 = vadd.f32 %v277, %v321
  %v330 = vadd.f32 %v278, %v322
  %v331 = vadd.f32 %v279, %v323
  %v332 = vadd.f32 %v280, %v324
  %334 = vset.pattern.permute.xlu0 0
  %335 = vperm.xlu0 %334, %v22
  %v336 = vpop.permute.xlu0 %335
  %v338 = vmul.f32 %v336, %v64
  %v339 = vmul.f32 %v336, %v68
  %v340 = vmul.f32 %v336, %v289
  %v341 = vmul.f32 %v336, %v72
  %v342 = vmul.f32 %v336, %v76
  %v343 = vmul.f32 %v336, %v293
  %350 = vrot.lane.b32.xlu0 %v338, 94
  %v351 = vpop.permute.xlu0 %350
  %352 = vrot.lane.b32.xlu0 %v339, 94
  %v353 = vpop.permute.xlu0 %352
  %354 = vrot.lane.b32.xlu0 %v340, 94
  %v355 = vpop.permute.xlu0 %354
  %356 = vrot.lane.b32.xlu0 %v341, 94
  %v357 = vpop.permute.xlu0 %356
  %358 = vrot.lane.b32.xlu0 %v342, 94
  %v359 = vpop.permute.xlu0 %358
  %360 = vrot.lane.b32.xlu0 %v343, 94
  %v361 = vpop.permute.xlu0 %360
  %vm362 = vcmask 769024
  %v363 = vsel %vm362, %v351, %v353
  %v364 = vsel %vm362, %v353, %v355
  %v365 = vsel %vm362, %v357, %v359
  %v366 = vsel %vm362, %v359, %v361
  %v371 = vadd.f32 %v329, %v363
  %v372 = vadd.f32 %v330, %v364
  %v373 = vadd.f32 %v331, %v365
  %v374 = vadd.f32 %v332, %v366
  %v377 = vunpack.c.l.s4 1966171168
  %v378 = vunpack.c.0.s8 %v377
  %v379 = vlaneseq
  %v380 = vshrl.u32 %v379, 7
  %v381 = vsub.s32 %v378, %v380
  %v382 = vrot.slane %v12, %v381
  %v383 = vcombine.high %v382, %v382
  %385 = vset.pattern.permute.xlu0 0
  %386 = vperm.xlu0 %385, %v23
  %v387 = vpop.permute.xlu0 %386
  %v389 = vlaneseq
  %v390 = vshrl.u32 %v389, 7
  %v391 = vsub.s32 0, %v390
  %v392 = vrot.slane %v382, %v391
  %v393 = vlaneseq
  %v394 = vshrl.u32 %v393, 7
  %v395 = vsub.s32 1, %v394
  %v396 = vrot.slane %v382, %v395
  %v397 = vlaneseq
  %v398 = vshrl.u32 %v397, 7
  %v399 = vsub.s32 0, %v398
  %v400 = vrot.slane %v383, %v399
  %v401 = vlaneseq
  %v402 = vshrl.u32 %v401, 7
  %v403 = vsub.s32 1, %v402
  %v404 = vrot.slane %v383, %v403
  %v409 = vmul.f32 %v387, %v392
  %v410 = vmul.f32 %v387, %v396
  %v411 = vmul.f32 %v387, %v400
  %v412 = vmul.f32 %v387, %v404
  %v413 = vadd.f32 %v371, %v409
  %v414 = vadd.f32 %v372, %v410
  %v415 = vadd.f32 %v373, %v411
  %v416 = vadd.f32 %v374, %v412
  %418 = vset.pattern.permute.xlu0 0
  %419 = vperm.xlu0 %418, %v24
  %v420 = vpop.permute.xlu0 %419
  %v422 = vmul.f32 %v420, %v392
  %v423 = vmul.f32 %v420, %v396
  %v424 = vmul.f32 %v420, %v400
  %v425 = vmul.f32 %v420, %v404
  %430 = vrot.lane.b32.xlu0 %v422, 127
  %v431 = vpop.permute.xlu0 %430
  %432 = vrot.lane.b32.xlu0 %v423, 127
  %v433 = vpop.permute.xlu0 %432
  %434 = vrot.lane.b32.xlu0 %v424, 127
  %v435 = vpop.permute.xlu0 %434
  %436 = vrot.lane.b32.xlu0 %v425, 127
  %v437 = vpop.permute.xlu0 %436
  %v438 = vsel %vm110, %v431, %v433
  %v439 = vsel %vm110, %v435, %v437
  %v444 = vadd.f32 %v413, %v438
  %v445 = vadd.f32 %v414, %v433
  %v446 = vadd.f32 %v415, %v439
  %v447 = vadd.f32 %v416, %v437
  %449 = vset.pattern.permute.xlu0 0
  %450 = vperm.xlu0 %449, %v25
  %v451 = vpop.permute.xlu0 %450
  %v453 = vmul.f32 %v451, %v392
  %v454 = vmul.f32 %v451, %v396
  %v455 = vmul.f32 %v451, %v400
  %v456 = vmul.f32 %v451, %v404
  %461 = vrot.lane.b32.xlu0 %v453, 126
  %v462 = vpop.permute.xlu0 %461
  %463 = vrot.lane.b32.xlu0 %v454, 126
  %v464 = vpop.permute.xlu0 %463
  %465 = vrot.lane.b32.xlu0 %v455, 126
  %v466 = vpop.permute.xlu0 %465
  %467 = vrot.lane.b32.xlu0 %v456, 126
  %v468 = vpop.permute.xlu0 %467
  %v469 = vsel %vm142, %v462, %v464
  %v470 = vsel %vm142, %v466, %v468
  %v475 = vadd.f32 %v444, %v469
  %v476 = vadd.f32 %v445, %v464
  %v477 = vadd.f32 %v446, %v470
  %v478 = vadd.f32 %v447, %v468
  %480 = vset.pattern.permute.xlu0 0
  %481 = vperm.xlu0 %480, %v26
  %v482 = vpop.permute.xlu0 %481
  %v484 = vmul.f32 %v482, %v392
  %v485 = vmul.f32 %v482, %v396
  %v486 = vmul.f32 %v482, %v400
  %v487 = vmul.f32 %v482, %v404
  %492 = vrot.lane.b32.xlu0 %v484, 112
  %v493 = vpop.permute.xlu0 %492
  %494 = vrot.lane.b32.xlu0 %v485, 112
  %v495 = vpop.permute.xlu0 %494
  %496 = vrot.lane.b32.xlu0 %v486, 112
  %v497 = vpop.permute.xlu0 %496
  %498 = vrot.lane.b32.xlu0 %v487, 112
  %v499 = vpop.permute.xlu0 %498
  %v500 = vsel %vm174, %v493, %v495
  %v501 = vsel %vm174, %v497, %v499
  %v506 = vadd.f32 %v475, %v500
  %v507 = vadd.f32 %v476, %v495
  %v508 = vadd.f32 %v477, %v501
  %v509 = vadd.f32 %v478, %v499
  %511 = vset.pattern.permute.xlu0 0
  %512 = vperm.xlu0 %511, %v27
  %v513 = vpop.permute.xlu0 %512
  %v515 = vmul.f32 %v513, %v392
  %v516 = vmul.f32 %v513, %v396
  %v517 = vmul.f32 %v513, %v400
  %v518 = vmul.f32 %v513, %v404
  %523 = vrot.lane.b32.xlu0 %v515, 111
  %v524 = vpop.permute.xlu0 %523
  %525 = vrot.lane.b32.xlu0 %v516, 111
  %v526 = vpop.permute.xlu0 %525
  %527 = vrot.lane.b32.xlu0 %v517, 111
  %v528 = vpop.permute.xlu0 %527
  %529 = vrot.lane.b32.xlu0 %v518, 111
  %v530 = vpop.permute.xlu0 %529
  %v531 = vsel %vm206, %v524, %v526
  %v532 = vsel %vm206, %v528, %v530
  %v537 = vadd.f32 %v506, %v531
  %v538 = vadd.f32 %v507, %v526
  %v539 = vadd.f32 %v508, %v532
  %v540 = vadd.f32 %v509, %v530
  %542 = vset.pattern.permute.xlu0 0
  %543 = vperm.xlu0 %542, %v28
  %v544 = vpop.permute.xlu0 %543
  %v546 = vmul.f32 %v544, %v392
  %v547 = vmul.f32 %v544, %v396
  %v548 = vmul.f32 %v544, %v400
  %v549 = vmul.f32 %v544, %v404
  %554 = vrot.lane.b32.xlu0 %v546, 110
  %v555 = vpop.permute.xlu0 %554
  %556 = vrot.lane.b32.xlu0 %v547, 110
  %v557 = vpop.permute.xlu0 %556
  %558 = vrot.lane.b32.xlu0 %v548, 110
  %v559 = vpop.permute.xlu0 %558
  %560 = vrot.lane.b32.xlu0 %v549, 110
  %v561 = vpop.permute.xlu0 %560
  %v562 = vsel %vm238, %v555, %v557
  %v563 = vsel %vm238, %v559, %v561
  %v568 = vadd.f32 %v537, %v562
  %v569 = vadd.f32 %v538, %v557
  %v570 = vadd.f32 %v539, %v563
  %v571 = vadd.f32 %v540, %v561
  %573 = vset.pattern.permute.xlu0 0
  %574 = vperm.xlu0 %573, %v29
  %v575 = vpop.permute.xlu0 %574
  %v577 = vmul.f32 %v575, %v392
  %v578 = vmul.f32 %v575, %v396
  %v579 = vmul.f32 %v575, %v400
  %v580 = vmul.f32 %v575, %v404
  %585 = vrot.lane.b32.xlu0 %v577, 96
  %v586 = vpop.permute.xlu0 %585
  %587 = vrot.lane.b32.xlu0 %v578, 96
  %v588 = vpop.permute.xlu0 %587
  %589 = vrot.lane.b32.xlu0 %v579, 96
  %v590 = vpop.permute.xlu0 %589
  %591 = vrot.lane.b32.xlu0 %v580, 96
  %v592 = vpop.permute.xlu0 %591
  %v593 = vsel %vm270, %v586, %v588
  %v594 = vsel %vm270, %v590, %v592
  %v599 = vadd.f32 %v568, %v593
  %v600 = vadd.f32 %v569, %v588
  %v601 = vadd.f32 %v570, %v594
  %v602 = vadd.f32 %v571, %v592
  %604 = vset.pattern.permute.xlu0 0
  %605 = vperm.xlu0 %604, %v30
  %v606 = vpop.permute.xlu0 %605
  %v608 = vlaneseq
  %v609 = vshrl.u32 %v608, 7
  %v610 = vsub.s32 2, %v609
  %v611 = vrot.slane %v382, %v610
  %v612 = vlaneseq
  %v613 = vshrl.u32 %v612, 7
  %v614 = vsub.s32 2, %v613
  %v615 = vrot.slane %v383, %v614
  %v618 = vmul.f32 %v606, %v392
  %v619 = vmul.f32 %v606, %v396
  %v620 = vmul.f32 %v606, %v611
  %v621 = vmul.f32 %v606, %v400
  %v622 = vmul.f32 %v606, %v404
  %v623 = vmul.f32 %v606, %v615
  %630 = vrot.lane.b32.xlu0 %v618, 95
  %v631 = vpop.permute.xlu0 %630
  %632 = vrot.lane.b32.xlu0 %v619, 95
  %v633 = vpop.permute.xlu0 %632
  %634 = vrot.lane.b32.xlu0 %v620, 95
  %v635 = vpop.permute.xlu0 %634
  %636 = vrot.lane.b32.xlu0 %v621, 95
  %v637 = vpop.permute.xlu0 %636
  %638 = vrot.lane.b32.xlu0 %v622, 95
  %v639 = vpop.permute.xlu0 %638
  %640 = vrot.lane.b32.xlu0 %v623, 95
  %v641 = vpop.permute.xlu0 %640
  %v642 = vsel %vm320, %v631, %v633
  %v643 = vsel %vm320, %v633, %v635
  %v644 = vsel %vm320, %v637, %v639
  %v645 = vsel %vm320, %v639, %v641
  %v650 = vadd.f32 %v599, %v642
  %v651 = vadd.f32 %v600, %v643
  %v652 = vadd.f32 %v601, %v644
  %v653 = vadd.f32 %v602, %v645
  %655 = vset.pattern.permute.xlu0 0
  %656 = vperm.xlu0 %655, %v31
  %v657 = vpop.permute.xlu0 %656
  %v659 = vmul.f32 %v657, %v392
  %v660 = vmul.f32 %v657, %v396
  %v661 = vmul.f32 %v657, %v611
  %v662 = vmul.f32 %v657, %v400
  %v663 = vmul.f32 %v657, %v404
  %v664 = vmul.f32 %v657, %v615
  %671 = vrot.lane.b32.xlu0 %v659, 94
  %v672 = vpop.permute.xlu0 %671
  %673 = vrot.lane.b32.xlu0 %v660, 94
  %v674 = vpop.permute.xlu0 %673
  %675 = vrot.lane.b32.xlu0 %v661, 94
  %v676 = vpop.permute.xlu0 %675
  %677 = vrot.lane.b32.xlu0 %v662, 94
  %v678 = vpop.permute.xlu0 %677
  %679 = vrot.lane.b32.xlu0 %v663, 94
  %v680 = vpop.permute.xlu0 %679
  %681 = vrot.lane.b32.xlu0 %v664, 94
  %v682 = vpop.permute.xlu0 %681
  %v683 = vsel %vm362, %v672, %v674
  %v684 = vsel %vm362, %v674, %v676
  %v685 = vsel %vm362, %v678, %v680
  %v686 = vsel %vm362, %v680, %v682
  %v691 = vadd.f32 %v650, %v683
  %v692 = vadd.f32 %v651, %v684
  %v693 = vadd.f32 %v652, %v685
  %v694 = vadd.f32 %v653, %v686
  %v697 = vunpack.c.l.s4 1966171168
  %v698 = vunpack.c.0.s8 %v697
  %v699 = vlaneseq
  %v700 = vshrl.u32 %v699, 7
  %v701 = vsub.s32 %v698, %v700
  %v702 = vrot.slane %v13, %v701
  %v703 = vcombine.high %v702, %v702
  %705 = vset.pattern.permute.xlu0 0
  %706 = vperm.xlu0 %705, %v32
  %v707 = vpop.permute.xlu0 %706
  %v709 = vlaneseq
  %v710 = vshrl.u32 %v709, 7
  %v711 = vsub.s32 0, %v710
  %v712 = vrot.slane %v702, %v711
  %v713 = vlaneseq
  %v714 = vshrl.u32 %v713, 7
  %v715 = vsub.s32 1, %v714
  %v716 = vrot.slane %v702, %v715
  %v717 = vlaneseq
  %v718 = vshrl.u32 %v717, 7
  %v719 = vsub.s32 0, %v718
  %v720 = vrot.slane %v703, %v719
  %v721 = vlaneseq
  %v722 = vshrl.u32 %v721, 7
  %v723 = vsub.s32 1, %v722
  %v724 = vrot.slane %v703, %v723
  %v729 = vmul.f32 %v707, %v712
  %v730 = vmul.f32 %v707, %v716
  %v731 = vmul.f32 %v707, %v720
  %v732 = vmul.f32 %v707, %v724
  %v733 = vadd.f32 %v691, %v729
  %v734 = vadd.f32 %v692, %v730
  %v735 = vadd.f32 %v693, %v731
  %v736 = vadd.f32 %v694, %v732
  %738 = vset.pattern.permute.xlu0 0
  %739 = vperm.xlu0 %738, %v33
  %v740 = vpop.permute.xlu0 %739
  %v742 = vmul.f32 %v740, %v712
  %v743 = vmul.f32 %v740, %v716
  %v744 = vmul.f32 %v740, %v720
  %v745 = vmul.f32 %v740, %v724
  %750 = vrot.lane.b32.xlu0 %v742, 127
  %v751 = vpop.permute.xlu0 %750
  %752 = vrot.lane.b32.xlu0 %v743, 127
  %v753 = vpop.permute.xlu0 %752
  %754 = vrot.lane.b32.xlu0 %v744, 127
  %v755 = vpop.permute.xlu0 %754
  %756 = vrot.lane.b32.xlu0 %v745, 127
  %v757 = vpop.permute.xlu0 %756
  %v758 = vsel %vm110, %v751, %v753
  %v759 = vsel %vm110, %v755, %v757
  %v764 = vadd.f32 %v733, %v758
  %v765 = vadd.f32 %v734, %v753
  %v766 = vadd.f32 %v735, %v759
  %v767 = vadd.f32 %v736, %v757
  %769 = vset.pattern.permute.xlu0 0
  %770 = vperm.xlu0 %769, %v34
  %v771 = vpop.permute.xlu0 %770
  %v773 = vmul.f32 %v771, %v712
  %v774 = vmul.f32 %v771, %v716
  %v775 = vmul.f32 %v771, %v720
  %v776 = vmul.f32 %v771, %v724
  %781 = vrot.lane.b32.xlu0 %v773, 126
  %v782 = vpop.permute.xlu0 %781
  %783 = vrot.lane.b32.xlu0 %v774, 126
  %v784 = vpop.permute.xlu0 %783
  %785 = vrot.lane.b32.xlu0 %v775, 126
  %v786 = vpop.permute.xlu0 %785
  %787 = vrot.lane.b32.xlu0 %v776, 126
  %v788 = vpop.permute.xlu0 %787
  %v789 = vsel %vm142, %v782, %v784
  %v790 = vsel %vm142, %v786, %v788
  %v795 = vadd.f32 %v764, %v789
  %v796 = vadd.f32 %v765, %v784
  %v797 = vadd.f32 %v766, %v790
  %v798 = vadd.f32 %v767, %v788
  %800 = vset.pattern.permute.xlu0 0
  %801 = vperm.xlu0 %800, %v35
  %v802 = vpop.permute.xlu0 %801
  %v804 = vmul.f32 %v802, %v712
  %v805 = vmul.f32 %v802, %v716
  %v806 = vmul.f32 %v802, %v720
  %v807 = vmul.f32 %v802, %v724
  %812 = vrot.lane.b32.xlu0 %v804, 112
  %v813 = vpop.permute.xlu0 %812
  %814 = vrot.lane.b32.xlu0 %v805, 112
  %v815 = vpop.permute.xlu0 %814
  %816 = vrot.lane.b32.xlu0 %v806, 112
  %v817 = vpop.permute.xlu0 %816
  %818 = vrot.lane.b32.xlu0 %v807, 112
  %v819 = vpop.permute.xlu0 %818
  %v820 = vsel %vm174, %v813, %v815
  %v821 = vsel %vm174, %v817, %v819
  %v826 = vadd.f32 %v795, %v820
  %v827 = vadd.f32 %v796, %v815
  %v828 = vadd.f32 %v797, %v821
  %v829 = vadd.f32 %v798, %v819
  %831 = vset.pattern.permute.xlu0 0
  %832 = vperm.xlu0 %831, %v36
  %v833 = vpop.permute.xlu0 %832
  %v835 = vmul.f32 %v833, %v712
  %v836 = vmul.f32 %v833, %v716
  %v837 = vmul.f32 %v833, %v720
  %v838 = vmul.f32 %v833, %v724
  %843 = vrot.lane.b32.xlu0 %v835, 111
  %v844 = vpop.permute.xlu0 %843
  %845 = vrot.lane.b32.xlu0 %v836, 111
  %v846 = vpop.permute.xlu0 %845
  %847 = vrot.lane.b32.xlu0 %v837, 111
  %v848 = vpop.permute.xlu0 %847
  %849 = vrot.lane.b32.xlu0 %v838, 111
  %v850 = vpop.permute.xlu0 %849
  %v851 = vsel %vm206, %v844, %v846
  %v852 = vsel %vm206, %v848, %v850
  %v857 = vadd.f32 %v826, %v851
  %v858 = vadd.f32 %v827, %v846
  %v859 = vadd.f32 %v828, %v852
  %v860 = vadd.f32 %v829, %v850
  %862 = vset.pattern.permute.xlu0 0
  %863 = vperm.xlu0 %862, %v37
  %v864 = vpop.permute.xlu0 %863
  %v866 = vmul.f32 %v864, %v712
  %v867 = vmul.f32 %v864, %v716
  %v868 = vmul.f32 %v864, %v720
  %v869 = vmul.f32 %v864, %v724
  %874 = vrot.lane.b32.xlu0 %v866, 110
  %v875 = vpop.permute.xlu0 %874
  %876 = vrot.lane.b32.xlu0 %v867, 110
  %v877 = vpop.permute.xlu0 %876
  %878 = vrot.lane.b32.xlu0 %v868, 110
  %v879 = vpop.permute.xlu0 %878
  %880 = vrot.lane.b32.xlu0 %v869, 110
  %v881 = vpop.permute.xlu0 %880
  %v882 = vsel %vm238, %v875, %v877
  %v883 = vsel %vm238, %v879, %v881
  %v888 = vadd.f32 %v857, %v882
  %v889 = vadd.f32 %v858, %v877
  %v890 = vadd.f32 %v859, %v883
  %v891 = vadd.f32 %v860, %v881
  %893 = vset.pattern.permute.xlu0 0
  %894 = vperm.xlu0 %893, %v38
  %v895 = vpop.permute.xlu0 %894
  %v897 = vmul.f32 %v895, %v712
  %v898 = vmul.f32 %v895, %v716
  %v899 = vmul.f32 %v895, %v720
  %v900 = vmul.f32 %v895, %v724
  %905 = vrot.lane.b32.xlu0 %v897, 96
  %v906 = vpop.permute.xlu0 %905
  %907 = vrot.lane.b32.xlu0 %v898, 96
  %v908 = vpop.permute.xlu0 %907
  %909 = vrot.lane.b32.xlu0 %v899, 96
  %v910 = vpop.permute.xlu0 %909
  %911 = vrot.lane.b32.xlu0 %v900, 96
  %v912 = vpop.permute.xlu0 %911
  %v913 = vsel %vm270, %v906, %v908
  %v914 = vsel %vm270, %v910, %v912
  %v919 = vadd.f32 %v888, %v913
  %v920 = vadd.f32 %v889, %v908
  %v921 = vadd.f32 %v890, %v914
  %v922 = vadd.f32 %v891, %v912
  %924 = vset.pattern.permute.xlu0 0
  %925 = vperm.xlu0 %924, %v39
  %v926 = vpop.permute.xlu0 %925
  %v928 = vlaneseq
  %v929 = vshrl.u32 %v928, 7
  %v930 = vsub.s32 2, %v929
  %v931 = vrot.slane %v702, %v930
  %v932 = vlaneseq
  %v933 = vshrl.u32 %v932, 7
  %v934 = vsub.s32 2, %v933
  %v935 = vrot.slane %v703, %v934
  %v938 = vmul.f32 %v926, %v712
  %v939 = vmul.f32 %v926, %v716
  %v940 = vmul.f32 %v926, %v931
  %v941 = vmul.f32 %v926, %v720
  %v942 = vmul.f32 %v926, %v724
  %v943 = vmul.f32 %v926, %v935
  %950 = vrot.lane.b32.xlu0 %v938, 95
  %v951 = vpop.permute.xlu0 %950
  %952 = vrot.lane.b32.xlu0 %v939, 95
  %v953 = vpop.permute.xlu0 %952
  %954 = vrot.lane.b32.xlu0 %v940, 95
  %v955 = vpop.permute.xlu0 %954
  %956 = vrot.lane.b32.xlu0 %v941, 95
  %v957 = vpop.permute.xlu0 %956
  %958 = vrot.lane.b32.xlu0 %v942, 95
  %v959 = vpop.permute.xlu0 %958
  %960 = vrot.lane.b32.xlu0 %v943, 95
  %v961 = vpop.permute.xlu0 %960
  %v962 = vsel %vm320, %v951, %v953
  %v963 = vsel %vm320, %v953, %v955
  %v964 = vsel %vm320, %v957, %v959
  %v965 = vsel %vm320, %v959, %v961
  %v970 = vadd.f32 %v919, %v962
  %v971 = vadd.f32 %v920, %v963
  %v972 = vadd.f32 %v921, %v964
  %v973 = vadd.f32 %v922, %v965
  %975 = vset.pattern.permute.xlu0 0
  %976 = vperm.xlu0 %975, %v40
  %v977 = vpop.permute.xlu0 %976
  %v979 = vmul.f32 %v977, %v712
  %v980 = vmul.f32 %v977, %v716
  %v981 = vmul.f32 %v977, %v931
  %v982 = vmul.f32 %v977, %v720
  %v983 = vmul.f32 %v977, %v724
  %v984 = vmul.f32 %v977, %v935
  %991 = vrot.lane.b32.xlu0 %v979, 94
  %v992 = vpop.permute.xlu0 %991
  %993 = vrot.lane.b32.xlu0 %v980, 94
  %v994 = vpop.permute.xlu0 %993
  %995 = vrot.lane.b32.xlu0 %v981, 94
  %v996 = vpop.permute.xlu0 %995
  %997 = vrot.lane.b32.xlu0 %v982, 94
  %v998 = vpop.permute.xlu0 %997
  %999 = vrot.lane.b32.xlu0 %v983, 94
  %v1000 = vpop.permute.xlu0 %999
  %1001 = vrot.lane.b32.xlu0 %v984, 94
  %v1002 = vpop.permute.xlu0 %1001
  %v1003 = vsel %vm362, %v992, %v994
  %v1004 = vsel %vm362, %v994, %v996
  %v1005 = vsel %vm362, %v998, %v1000
  %v1006 = vsel %vm362, %v1000, %v1002
  %v1011 = vadd.f32 %v970, %v1003
  %v1012 = vadd.f32 %v971, %v1004
  %v1013 = vadd.f32 %v972, %v1005
  %v1014 = vadd.f32 %v973, %v1006
  %1015 = vst [vmem:[%s2] sm:$0xff] %v1011
  %1016 = vst.msk [vmem:[%s2 + $0x8] sm:$0xff] %vm270, %v1012
  %1017 = vst [vmem:[%s2 + $0x10] sm:$0xff] %v1013
  %1018 = vst.msk [vmem:[%s2 + $0x18] sm:$0xff] %vm270, %v1014
  // Predicated region
  $region10: #{conv2d_pallas.1} parent=0 // pred_check
    _
  $region11: #{conv2d_pallas.1} parent=0 // pred_check_branch
    %1020 = sbr.rel (0) target = $region13
  $region12: #{conv2d_pallas.1} parent=0 // pred_region
    _
  $region13: #{conv2d_pallas.1} parent=0 // pred_fallthru
    _
  // Predicated region
  $region14: #{conv2d_pallas.1} parent=0 // pred_check
    _
  $region15: #{conv2d_pallas.1} parent=0 // pred_check_branch
    %1022 = sbr.rel (0) target = $region17
  $region16: #{conv2d_pallas.1} parent=0 // pred_region
    _
  $region17: #{conv2d_pallas.1} parent=0 // pred_fallthru
    _

</llo_original>
